<compile_context>
chip_gen: v7x
topology: tpu7x:2x2x1
jax: 0.10.0
libtpu: 0.0.40
codegen_flags: <defaults>
</compile_context>

<pallas_src>
import jax
import jax.numpy as jnp
from jax.experimental import pallas as pl
from jax.experimental.pallas import tpu as pltpu


def _conv3x3_rows(x_rows, B_ref):
    """3x3 conv (padding=1) on lane-folded rows.

    x_rows : (H, W*Cin) activation rows, NOT padded.
    B_ref  : (3, W*Cin, W*Cout) banded weights; B_ref[ky] already contains the kx
             taps and the zero-padding along W.
    returns: (H, W*Cout) float32.
    """
    H = x_rows.shape[0]
    y0 = jnp.dot(x_rows, B_ref[0], preferred_element_type=jnp.float32)
    y1 = jnp.dot(x_rows, B_ref[1], preferred_element_type=jnp.float32)
    y2 = jnp.dot(x_rows, B_ref[2], preferred_element_type=jnp.float32)

    WCo = y1.shape[1]
    row = jax.lax.broadcasted_iota(jnp.int32, (H, WCo), 0)
    # ky=0 contributes x[h-1]: shift result down one row, zero row 0 (top padding).
    top = jnp.where(row == 0, 0.0, pltpu.roll(y0, shift=1, axis=0))
    # ky=2 contributes x[h+1]: shift result up one row, zero last row (bottom padding).
    bot = jnp.where(row == H - 1, 0.0, pltpu.roll(y2, shift=H - 1, axis=0))
    return top + y1 + bot


def _convblock_kernel(x_ref, B1_ref, b1_ref, B2_ref, b2_ref, out_ref):
    """One batch image per grid step.

    x_ref  : (1, H, W*Cin)   lane-folded NHWC input (unpadded)
    B1_ref : (3, W*Cin,  W*Cout) banded conv1 weights
    b1_ref : (1, W*Cout)         conv1 bias, tiled over W
    B2_ref : (3, W*Cout, W*Cout) banded conv2 weights
    b2_ref : (1, W*Cout)         conv2 bias, tiled over W
    out_ref: (1, H, W*Cout)      lane-dense output (W*Cout multiple of 128 here)
    """
    x = x_ref[0]                                              # (H, W*Cin)

    h1 = jnp.maximum(_conv3x3_rows(x, B1_ref) + b1_ref[...], 0.0)   # (H, W*Cout), f32
    h2 = jnp.maximum(_conv3x3_rows(h1, B2_ref) + b2_ref[...], 0.0)  # stays in vregs

    out_ref[0] = h2.astype(out_ref.dtype)


def _banded_weights(w, W):
    """Build banded block weights: (3,3,Cin,Cout) HWIO -> (3, W*Cin, W*Cout).

    B[ky, w_in*Cin + ci, w_out*Cout + co] = w[ky, kx, ci, co] where w_in = w_out+kx-1,
    and zero for out-of-range w_in — which implements the padding=1 boundary along W.
    """
    Cin, Cout = w.shape[2], w.shape[3]
    cols = jnp.arange(W)
    blocks = []
    for ky in range(3):
        acc = jnp.zeros((W, Cin, W, Cout), w.dtype)
        for kx in range(3):
            sel = (cols[:, None] == cols[None, :] + (kx - 1)).astype(w.dtype)  # (Win, Wout)
            acc = acc + sel[:, None, :, None] * w[ky, kx][None, :, None, :]
        blocks.append(acc.reshape(W * Cin, W * Cout))
    return jnp.stack(blocks, axis=0)


@jax.jit
def conv_block(x_nchw, w1, b1, w2, b2):
    """x_nchw: (N, Cin, H, W) float32. Weights in (3, 3, Cin, Cout) HWIO layout."""
    N, Cin, H, W = x_nchw.shape
    Cout = w1.shape[3]
    WCi, WCo = W * Cin, W * Cout

    # NCHW -> NHWC -> fold (W, C) into the lane axis (pure reshape of contiguous NHWC).
    # No jnp.pad: padding is absorbed into the banded weights (W) / row masking (H).
    x_f = jnp.transpose(x_nchw, (0, 2, 3, 1)).reshape(N, H, WCi)

    B1 = _banded_weights(w1, W)               # (3, W*Cin,  W*Cout)
    B2 = _banded_weights(w2, W)               # (3, W*Cout, W*Cout)
    b1_f = jnp.tile(b1, W).reshape(1, WCo)    # b1_f[w*Cout+co] = b1[co]
    b2_f = jnp.tile(b2, W).reshape(1, WCo)

    out_f = pl.pallas_call(
        _convblock_kernel,
        out_shape=jax.ShapeDtypeStruct((N, H, WCo), x_nchw.dtype),
        grid_spec=pltpu.PrefetchScalarGridSpec(
            num_scalar_prefetch=0,
            grid=(N,),
            in_specs=[
                pl.BlockSpec((1, H, WCi), lambda n: (n, 0, 0)),
                pl.BlockSpec((3, WCi, WCo), lambda n: (0, 0, 0)),
                pl.BlockSpec((1, WCo), lambda n: (0, 0)),
                pl.BlockSpec((3, WCo, WCo), lambda n: (0, 0, 0)),
                pl.BlockSpec((1, WCo), lambda n: (0, 0)),
            ],
            out_specs=pl.BlockSpec((1, H, WCo), lambda n: (n, 0, 0)),
        ),
        compiler_params=pltpu.CompilerParams(
            dimension_semantics=("parallel",)),
    )(x_f, B1, b1_f, B2, b2_f)

    # (N, H, W*Cout) -> (N, H, W, Cout) -> NCHW to match the PyTorch API.
    return jnp.transpose(out_f.reshape(N, H, W, Cout), (0, 3, 1, 2))


def _reference(x_nchw, w1, b1, w2, b2):
    """Pure-JAX reference with the same semantics as the PyTorch module."""
    def conv(x, w, b):
        y = jax.lax.conv_general_dilated(x, w, (1, 1), ((1, 1), (1, 1)),
                                         dimension_numbers=("NCHW", "HWIO", "NCHW"))
        return y + b.reshape(1, -1, 1, 1)
    h = jnp.maximum(conv(x_nchw, w1, b1), 0.0)
    return jnp.maximum(conv(h, w2, b2), 0.0)


if __name__ == "__main__":
    # Shapes consistent with ConvBlock(in_channels=4, out_channels=8)
    N, Cin, Cout, H, W = 2, 4, 8, 16, 16

    key = jax.random.PRNGKey(0)
    kx, k1, kb1, k2, kb2 = jax.random.split(key, 5)

    x = jax.random.normal(kx, (N, Cin, H, W), dtype=jnp.float32)
    # Deterministic "Kaiming-ish" init, HWIO layout (3, 3, in, out)
    w1 = jax.random.normal(k1, (3, 3, Cin, Cout), dtype=jnp.float32) * (1.0 / (3 * 3 * Cin) ** 0.5)
    b1 = jax.random.normal(kb1, (Cout,), dtype=jnp.float32) * 0.01
    w2 = jax.random.normal(k2, (3, 3, Cout, Cout), dtype=jnp.float32) * (1.0 / (3 * 3 * Cout) ** 0.5)
    b2 = jax.random.normal(kb2, (Cout,), dtype=jnp.float32) * 0.01

    out = conv_block(x, w1, b1, w2, b2)
    out = jax.block_until_ready(out)

    ref = _reference(x, w1, b1, w2, b2)
    assert out.shape == (N, Cout, H, W), out.shape
    assert jnp.allclose(out, ref, rtol=1e-4, atol=1e-4), float(jnp.max(jnp.abs(out - ref)))

    print("KERNEL_OK")
</pallas_src>

<mosaic_0001>
module attributes {stable_mosaic.version = 11 : i64} {
  func.func @_convblock_kernel(%arg0: i32, %arg1: memref<1x16x64xf32, #tpu.memory_space<vmem>>, %arg2: memref<3x64x128xf32, #tpu.memory_space<vmem>>, %arg3: memref<1x128xf32, #tpu.memory_space<vmem>>, %arg4: memref<3x128x128xf32, #tpu.memory_space<vmem>>, %arg5: memref<1x128xf32, #tpu.memory_space<vmem>>, %arg6: memref<1x16x128xf32, #tpu.memory_space<vmem>>) attributes {dimension_semantics = [#tpu.dimension_semantics<parallel>], iteration_bounds = array<i64: 2>, scalar_prefetch = 0 : i64, scratch_operands = 0 : i64, tpu.core_type = #tpu.core_type<tc>, window_params = [{transform_indices = @transform_0, window_bounds = array<i64: 1, 16, 64>}, {pipeline_mode = #tpu.pipeline_mode<synchronous>, transform_indices = @transform_1, window_bounds = array<i64: 3, 64, 128>}, {pipeline_mode = #tpu.pipeline_mode<synchronous>, transform_indices = @transform_2, window_bounds = array<i64: 1, 128>}, {pipeline_mode = #tpu.pipeline_mode<synchronous>, transform_indices = @transform_3, window_bounds = array<i64: 3, 128, 128>}, {pipeline_mode = #tpu.pipeline_mode<synchronous>, transform_indices = @transform_4, window_bounds = array<i64: 1, 128>}, {transform_indices = @transform_5, window_bounds = array<i64: 1, 16, 128>}]} {
    %c0 = arith.constant 0 : index
    %c0_0 = arith.constant 0 : index
    %c0_1 = arith.constant 0 : index
    %0 = vector.load %arg1[%c0, %c0_0, %c0_1] : memref<1x16x64xf32, #tpu.memory_space<vmem>>, vector<1x16x64xf32>
    %1 = vector.shape_cast %0 : vector<1x16x64xf32> to vector<16x64xf32>
    %c0_2 = arith.constant 0 : index
    %c0_3 = arith.constant 0 : index
    %c0_4 = arith.constant 0 : index
    %2 = vector.load %arg2[%c0_2, %c0_3, %c0_4] : memref<3x64x128xf32, #tpu.memory_space<vmem>>, vector<1x64x128xf32>
    %3 = vector.shape_cast %2 : vector<1x64x128xf32> to vector<64x128xf32>
    %cst = arith.constant dense<0.000000e+00> : vector<16x128xf32>
    %4 = tpu.matmul %1, %3, %cst {dimension_numbers = #tpu.dot_dimension_numbers<[1], [0], [0], [1], [0, 0, 1, 1], [], []>} : vector<16x64xf32>, vector<64x128xf32>, vector<16x128xf32> -> vector<16x128xf32>
    %c1 = arith.constant 1 : index
    %c0_5 = arith.constant 0 : index
    %c0_6 = arith.constant 0 : index
    %5 = vector.load %arg2[%c1, %c0_5, %c0_6] : memref<3x64x128xf32, #tpu.memory_space<vmem>>, vector<1x64x128xf32>
    %6 = vector.shape_cast %5 : vector<1x64x128xf32> to vector<64x128xf32>
    %cst_7 = arith.constant dense<0.000000e+00> : vector<16x128xf32>
    %7 = tpu.matmul %1, %6, %cst_7 {dimension_numbers = #tpu.dot_dimension_numbers<[1], [0], [0], [1], [0, 0, 1, 1], [], []>} : vector<16x64xf32>, vector<64x128xf32>, vector<16x128xf32> -> vector<16x128xf32>
    %c2 = arith.constant 2 : index
    %c0_8 = arith.constant 0 : index
    %c0_9 = arith.constant 0 : index
    %8 = vector.load %arg2[%c2, %c0_8, %c0_9] : memref<3x64x128xf32, #tpu.memory_space<vmem>>, vector<1x64x128xf32>
    %9 = vector.shape_cast %8 : vector<1x64x128xf32> to vector<64x128xf32>
    %cst_10 = arith.constant dense<0.000000e+00> : vector<16x128xf32>
    %10 = tpu.matmul %1, %9, %cst_10 {dimension_numbers = #tpu.dot_dimension_numbers<[1], [0], [0], [1], [0, 0, 1, 1], [], []>} : vector<16x64xf32>, vector<64x128xf32>, vector<16x128xf32> -> vector<16x128xf32>
    %11 = tpu.iota {dimensions = array<i32: 0>} : vector<16x128xi32>
    %c0_i32 = arith.constant 0 : i32
    %12 = vector.broadcast %c0_i32 : i32 to vector<16x128xi32>
    %13 = arith.cmpi eq, %11, %12 : vector<16x128xi32>
    %c1_i32 = arith.constant 1 : i32
    %14 = tpu.dynamic_rotate %4 by %c1_i32 dim 0 : vector<16x128xf32>, i32 -> vector<16x128xf32>
    %cst_11 = arith.constant 0.000000e+00 : f32
    %15 = vector.broadcast %cst_11 : f32 to vector<16x128xf32>
    %16 = arith.select %13, %15, %14 : vector<16x128xi1>, vector<16x128xf32>
    %c15_i32 = arith.constant 15 : i32
    %17 = vector.broadcast %c15_i32 : i32 to vector<16x128xi32>
    %18 = arith.cmpi eq, %11, %17 : vector<16x128xi32>
    %c15_i32_12 = arith.constant 15 : i32
    %19 = tpu.dynamic_rotate %10 by %c15_i32_12 dim 0 : vector<16x128xf32>, i32 -> vector<16x128xf32>
    %cst_13 = arith.constant 0.000000e+00 : f32
    %20 = vector.broadcast %cst_13 : f32 to vector<16x128xf32>
    %21 = arith.select %18, %20, %19 : vector<16x128xi1>, vector<16x128xf32>
    %22 = arith.addf %16, %7 : vector<16x128xf32>
    %23 = arith.addf %22, %21 : vector<16x128xf32>
    %c0_14 = arith.constant 0 : index
    %c0_15 = arith.constant 0 : index
    %24 = vector.load %arg3[%c0_14, %c0_15] : memref<1x128xf32, #tpu.memory_space<vmem>>, vector<1x128xf32>
    %25 = vector.broadcast %24 : vector<1x128xf32> to vector<16x128xf32>
    %26 = arith.addf %23, %25 : vector<16x128xf32>
    %cst_16 = arith.constant 0.000000e+00 : f32
    %27 = vector.broadcast %cst_16 : f32 to vector<16x128xf32>
    %28 = arith.maximumf %26, %27 : vector<16x128xf32>
    %c0_17 = arith.constant 0 : index
    %c0_18 = arith.constant 0 : index
    %c0_19 = arith.constant 0 : index
    %29 = vector.load %arg4[%c0_17, %c0_18, %c0_19] : memref<3x128x128xf32, #tpu.memory_space<vmem>>, vector<1x128x128xf32>
    %30 = vector.shape_cast %29 : vector<1x128x128xf32> to vector<128x128xf32>
    %cst_20 = arith.constant dense<0.000000e+00> : vector<16x128xf32>
    %31 = tpu.matmul %28, %30, %cst_20 {dimension_numbers = #tpu.dot_dimension_numbers<[1], [0], [0], [1], [0, 0, 1, 1], [], []>} : vector<16x128xf32>, vector<128x128xf32>, vector<16x128xf32> -> vector<16x128xf32>
    %c1_21 = arith.constant 1 : index
    %c0_22 = arith.constant 0 : index
    %c0_23 = arith.constant 0 : index
    %32 = vector.load %arg4[%c1_21, %c0_22, %c0_23] : memref<3x128x128xf32, #tpu.memory_space<vmem>>, vector<1x128x128xf32>
    %33 = vector.shape_cast %32 : vector<1x128x128xf32> to vector<128x128xf32>
    %cst_24 = arith.constant dense<0.000000e+00> : vector<16x128xf32>
    %34 = tpu.matmul %28, %33, %cst_24 {dimension_numbers = #tpu.dot_dimension_numbers<[1], [0], [0], [1], [0, 0, 1, 1], [], []>} : vector<16x128xf32>, vector<128x128xf32>, vector<16x128xf32> -> vector<16x128xf32>
    %c2_25 = arith.constant 2 : index
    %c0_26 = arith.constant 0 : index
    %c0_27 = arith.constant 0 : index
    %35 = vector.load %arg4[%c2_25, %c0_26, %c0_27] : memref<3x128x128xf32, #tpu.memory_space<vmem>>, vector<1x128x128xf32>
    %36 = vector.shape_cast %35 : vector<1x128x128xf32> to vector<128x128xf32>
    %cst_28 = arith.constant dense<0.000000e+00> : vector<16x128xf32>
    %37 = tpu.matmul %28, %36, %cst_28 {dimension_numbers = #tpu.dot_dimension_numbers<[1], [0], [0], [1], [0, 0, 1, 1], [], []>} : vector<16x128xf32>, vector<128x128xf32>, vector<16x128xf32> -> vector<16x128xf32>
    %38 = tpu.iota {dimensions = array<i32: 0>} : vector<16x128xi32>
    %c0_i32_29 = arith.constant 0 : i32
    %39 = vector.broadcast %c0_i32_29 : i32 to vector<16x128xi32>
    %40 = arith.cmpi eq, %38, %39 : vector<16x128xi32>
    %c1_i32_30 = arith.constant 1 : i32
    %41 = tpu.dynamic_rotate %31 by %c1_i32_30 dim 0 : vector<16x128xf32>, i32 -> vector<16x128xf32>
    %cst_31 = arith.constant 0.000000e+00 : f32
    %42 = vector.broadcast %cst_31 : f32 to vector<16x128xf32>
    %43 = arith.select %40, %42, %41 : vector<16x128xi1>, vector<16x128xf32>
    %c15_i32_32 = arith.constant 15 : i32
    %44 = vector.broadcast %c15_i32_32 : i32 to vector<16x128xi32>
    %45 = arith.cmpi eq, %38, %44 : vector<16x128xi32>
    %c15_i32_33 = arith.constant 15 : i32
    %46 = tpu.dynamic_rotate %37 by %c15_i32_33 dim 0 : vector<16x128xf32>, i32 -> vector<16x128xf32>
    %cst_34 = arith.constant 0.000000e+00 : f32
    %47 = vector.broadcast %cst_34 : f32 to vector<16x128xf32>
    %48 = arith.select %45, %47, %46 : vector<16x128xi1>, vector<16x128xf32>
    %49 = arith.addf %43, %34 : vector<16x128xf32>
    %50 = arith.addf %49, %48 : vector<16x128xf32>
    %c0_35 = arith.constant 0 : index
    %c0_36 = arith.constant 0 : index
    %51 = vector.load %arg5[%c0_35, %c0_36] : memref<1x128xf32, #tpu.memory_space<vmem>>, vector<1x128xf32>
    %52 = vector.broadcast %51 : vector<1x128xf32> to vector<16x128xf32>
    %53 = arith.addf %50, %52 : vector<16x128xf32>
    %cst_37 = arith.constant 0.000000e+00 : f32
    %54 = vector.broadcast %cst_37 : f32 to vector<16x128xf32>
    %55 = arith.maximumf %53, %54 : vector<16x128xf32>
    %c0_38 = arith.constant 0 : index
    %c0_39 = arith.constant 0 : index
    %c0_40 = arith.constant 0 : index
    %56 = vector.load %arg6[%c0_38, %c0_39, %c0_40] : memref<1x16x128xf32, #tpu.memory_space<vmem>>, vector<1x16x128xf32>
    %57 = vector.shape_cast %56 : vector<1x16x128xf32> to vector<16x128xf32>
    %58 = vector.shape_cast %55 : vector<16x128xf32> to vector<1x16x128xf32>
    tpu.vector_store %arg6[%c0_38, %c0_39, %c0_40], %58 {strides = array<i32>} : memref<1x16x128xf32, #tpu.memory_space<vmem>>, vector<1x16x128xf32>,
    return
  }
  func.func @transform_0(%arg0: i32) -> (i32, i32, i32) {
    %c0_i32 = arith.constant 0 : i32
    %c0_i32_0 = arith.constant 0 : i32
    %c0_i32_1 = arith.constant 0 : i32
    return %arg0, %c0_i32, %c0_i32_0 : i32, i32, i32
  }
  func.func @transform_1(%arg0: i32) -> (i32, i32, i32) {
    %c0_i32 = arith.constant 0 : i32
    %c0_i32_0 = arith.constant 0 : i32
    %c0_i32_1 = arith.constant 0 : i32
    %c0_i32_2 = arith.constant 0 : i32
    return %c0_i32, %c0_i32_0, %c0_i32_1 : i32, i32, i32
  }
  func.func @transform_2(%arg0: i32) -> (i32, i32) {
    %c0_i32 = arith.constant 0 : i32
    %c0_i32_0 = arith.constant 0 : i32
    %c0_i32_1 = arith.constant 0 : i32
    return %c0_i32, %c0_i32_0 : i32, i32
  }
  func.func @transform_3(%arg0: i32) -> (i32, i32, i32) {
    %c0_i32 = arith.constant 0 : i32
    %c0_i32_0 = arith.constant 0 : i32
    %c0_i32_1 = arith.constant 0 : i32
    %c0_i32_2 = arith.constant 0 : i32
    return %c0_i32, %c0_i32_0, %c0_i32_1 : i32, i32, i32
  }
  func.func @transform_4(%arg0: i32) -> (i32, i32) {
    %c0_i32 = arith.constant 0 : i32
    %c0_i32_0 = arith.constant 0 : i32
    %c0_i32_1 = arith.constant 0 : i32
    return %c0_i32, %c0_i32_0 : i32, i32
  }
  func.func @transform_5(%arg0: i32) -> (i32, i32, i32) {
    %c0_i32 = arith.constant 0 : i32
    %c0_i32_0 = arith.constant 0 : i32
    %c0_i32_1 = arith.constant 0 : i32
    return %arg0, %c0_i32, %c0_i32_0 : i32, i32, i32
  }
}

</mosaic_0001>

<llo_original>
// kernel: tile.13
$region0: #{tile.13}
  #allocation0 [shape = 's32[1]{0}', space=sflag, size = 0x4, scoped, tag = 'scoped memory for tile.13']
  %s0 = inlined_call_operand.vmem [shape: f32[8], index: 0, kind: input, shape index: {}]
  %s1 = inlined_call_operand.vmem [shape: f32[16,8], index: 1, kind: output, shape index: {}]
  // Predicated region
  $region2: #{tile.13} parent=0 // pred_check
    _
  $region3: #{tile.13} parent=0 // pred_check_branch
    %3 = sbr.rel (0) target = $region5
  $region4: #{tile.13} parent=0 // pred_region
    _
  $region5: #{tile.13} parent=0 // pred_fallthru
    _
  %v4 = vld [vmem:[%s0] ss:$0 sm:$0xff]
  %5 = vst [vmem:[%s1] sm:$0xff] %v4
  %s6 = scalar_lea.vmem %s1, 8
  %7 = vst [vmem:[%s6] sm:$0xff] %v4

// kernel: tile.14
$region0: #{tile.14}
  %s0 = inlined_call_operand.vmem [shape: f32[16,8], index: 0, kind: input, shape index: {}]
  %s1 = inlined_call_operand.vmem [shape: f32[1,128], index: 1, kind: output, shape index: {}]
  $region1: #{tile.14} parent=0
    #allocation0 [shape = 'u8[4096]{0}', space=vmem, size = 0x1000, scoped, tag = 'scoped mem for output reshape']
    %v2 = vld [vmem:[%s0] sm:$0x1]
    %vm3 = vcmask 64512
    %4 = vst.msk [vmem:[#allocation0] sm:$0x1] %vm3, %v2
    %s5 = scalar_lea.vmem %s0, 15
    %v6 = vld [vmem:[%s5] sm:$0x1]
    %7 = vrot.lane.b32.xlu0 %v6, 120
    %v8 = vpop.permute.xlu0 %7
    %vm9 = vcmask 1048512
    %10 = vst.msk [vmem:[#allocation0] sm:$0x1] %vm9, %v8
    %s11 = scalar_lea.vmem %s0, 14
    %v12 = vld [vmem:[%s11] sm:$0x1]
    %13 = vrot.lane.b32.xlu0 %v12, 112
    %v14 = vpop.permute.xlu0 %13
    %vm15 = vcmask 982912
    %16 = vst.msk [vmem:[#allocation0] sm:$0x1] %vm15, %v14
    %s17 = scalar_lea.vmem %s0, 13
    %v18 = vld [vmem:[%s17] sm:$0x1]
    %19 = vrot.lane.b32.xlu0 %v18, 104
    %v20 = vpop.permute.xlu0 %19
    %vm21 = vcmask 917312
    %22 = vst.msk [vmem:[#allocation0] sm:$0x1] %vm21, %v20
    %s23 = scalar_lea.vmem %s0, 12
    %v24 = vld [vmem:[%s23] sm:$0x1]
    %25 = vrot.lane.b32.xlu0 %v24, 96
    %v26 = vpop.permute.xlu0 %25
    %vm27 = vcmask 851712
    %28 = vst.msk [vmem:[#allocation0] sm:$0x1] %vm27, %v26
    %s29 = scalar_lea.vmem %s0, 11
    %v30 = vld [vmem:[%s29] sm:$0x1]
    %31 = vrot.lane.b32.xlu0 %v30, 88
    %v32 = vpop.permute.xlu0 %31
    %vm33 = vcmask 786112
    %34 = vst.msk [vmem:[#allocation0] sm:$0x1] %vm33, %v32
    %s35 = scalar_lea.vmem %s0, 10
    %v36 = vld [vmem:[%s35] sm:$0x1]
    %37 = vrot.lane.b32.xlu0 %v36, 80
    %v38 = vpop.permute.xlu0 %37
    %vm39 = vcmask 720512
    %40 = vst.msk [vmem:[#allocation0] sm:$0x1] %vm39, %v38
    %s41 = scalar_lea.vmem %s0, 9
    %v42 = vld [vmem:[%s41] sm:$0x1]
    %43 = vrot.lane.b32.xlu0 %v42, 72
    %v44 = vpop.permute.xlu0 %43
    %vm45 = vcmask 654912
    %46 = vst.msk [vmem:[#allocation0] sm:$0x1] %vm45, %v44
    %s47 = scalar_lea.vmem %s0, 8
    %v48 = vld [vmem:[%s47] sm:$0x1]
    %49 = vrot.lane.b32.xlu0 %v48, 64
    %v50 = vpop.permute.xlu0 %49
    %vm51 = vcmask 589312
    %52 = vst.msk [vmem:[#allocation0] sm:$0x1] %vm51, %v50
    %s53 = scalar_lea.vmem %s0, 7
    %v54 = vld [vmem:[%s53] sm:$0x1]
    %55 = vrot.lane.b32.xlu0 %v54, 56
    %v56 = vpop.permute.xlu0 %55
    %vm57 = vcmask 523712
    %58 = vst.msk [vmem:[#allocation0] sm:$0x1] %vm57, %v56
    %s59 = scalar_lea.vmem %s0, 6
    %v60 = vld [vmem:[%s59] sm:$0x1]
    %61 = vrot.lane.b32.xlu0 %v60, 48
    %v62 = vpop.permute.xlu0 %61
    %vm63 = vcmask 458112
    %64 = vst.msk [vmem:[#allocation0] sm:$0x1] %vm63, %v62
    %s65 = scalar_lea.vmem %s0, 5
    %v66 = vld [vmem:[%s65] sm:$0x1]
    %67 = vrot.lane.b32.xlu0 %v66, 40
    %v68 = vpop.permute.xlu0 %67
    %vm69 = vcmask 392512
    %70 = vst.msk [vmem:[#allocation0] sm:$0x1] %vm69, %v68
    %s71 = scalar_lea.vmem %s0, 4
    %v72 = vld [vmem:[%s71] sm:$0x1]
    %73 = vrot.lane.b32.xlu0 %v72, 32
    %v74 = vpop.permute.xlu0 %73
    %vm75 = vcmask 326912
    %76 = vst.msk [vmem:[#allocation0] sm:$0x1] %vm75, %v74
    %s77 = scalar_lea.vmem %s0, 3
    %v78 = vld [vmem:[%s77] sm:$0x1]
    %79 = vrot.lane.b32.xlu0 %v78, 24
    %v80 = vpop.permute.xlu0 %79
    %vm81 = vcmask 261312
    %82 = vst.msk [vmem:[#allocation0] sm:$0x1] %vm81, %v80
    %s83 = scalar_lea.vmem %s0, 2
    %v84 = vld [vmem:[%s83] sm:$0x1]
    %85 = vrot.lane.b32.xlu0 %v84, 16
    %v86 = vpop.permute.xlu0 %85
    %vm87 = vcmask 195712
    %88 = vst.msk [vmem:[#allocation0] sm:$0x1] %vm87, %v86
    %s89 = scalar_lea.vmem %s0, 1
    %v90 = vld [vmem:[%s89] sm:$0x1]
    %91 = vrot.lane.b32.xlu0 %v90, 8
    %v92 = vpop.permute.xlu0 %91
    %vm93 = vcmask 130112
    %94 = vst.msk [vmem:[#allocation0] sm:$0x1] %vm93, %v92
    %s96 = sshllo.u32 0, 1
    %v98 = vld [vmem:[#allocation0] sm:%s96]
    %s99 = sshllo.u32 0, 1
    %100 = vst [vmem:[%s1] sm:%s99] %v98

// kernel: conv_block.1
$region0: #{conv_block.1}
  #allocation0 [shape = 'u32[]', space=smem, size = 0x4, offset = 0x4, fixed_abs, tag = 'smem constant byte address 0x4 - core index']
  #allocation1 [shape = 'u32[144,128]{1,0:T(1,128)}', space=vmem, size = 0x12000, scoped, tag = 'internal scratch']
  %s0 = inlined_call_operand.vmem [shape: f32[2,16,64], index: 0, kind: input, shape index: {}]
  %s1 = inlined_call_operand.vmem [shape: f32[3,64,128], index: 1, kind: input, shape index: {}]
  %s2 = inlined_call_operand.vmem [shape: f32[1,128], index: 2, kind: input, shape index: {}]
  %s3 = inlined_call_operand.vmem [shape: f32[3,128,128], index: 3, kind: input, shape index: {}]
  %s4 = inlined_call_operand.vmem [shape: f32[1,128], index: 4, kind: input, shape index: {}]
  %s5 = inlined_call_operand.vmem [shape: f32[2,16,128], index: 5, kind: output, shape index: {}]
  %s6 = sld [smem:[#allocation0]]
  $region53: #{conv_block.1} parent=0
    _
  %s8 = ssub.s32 1, %s6
  %s9 = scalar_select 0, %s8, %s6
  loop: start=0, step=1, limit=4
  $region2: #{conv_block.1} parent=0 // loop_pre_header
    _
  $region3: #{conv_block.1} parent=0 // loop_header
    %s11 = sphi 0, %s15
    %p12 = scmp.ge.s32.totalorder %s11, 4
    %s21 = sphi 0, %s23
    %s24 = sphi 0, %s21
    %s25 = sphi 0, %s24
    %s41 = sphi 0, %s25
    %s45 = sphi 0, %s45
    %s47 = sphi 0, %s45
    %s48 = sphi 0, %s47
    %s62 = sphi 0, %s48
    %s66 = sphi 0, %s66
    %s68 = sphi 0, %s66
    %s69 = sphi 0, %s68
    %s83 = sphi 0, %s69
    %s87 = sphi 0, %s87
    %s89 = sphi 0, %s87
    %s90 = sphi 0, %s89
    %s104 = sphi 0, %s90
    %s108 = sphi 0, %s108
    %s110 = sphi 0, %s108
    %s111 = sphi 0, %s110
    %s125 = sphi 0, %s111
    %s131 = sphi 0, %s133
    %s134 = sphi 0, %s131
    %s135 = sphi 0, %s134
    %s151 = sphi 0, %s135
  $region4: #{conv_block.1} parent=0 // loop_header_branch
    %14 = sbr.rel (%p12) target = $region8
  $region5: #{conv_block.1} parent=0 // loop_body
    %s16 = ssub.s32 %s11, 1
    %s17 = ssub.s32 %s11, 2
    %s18 = sadd.s32 %s11, 1
    %s19 = ssub.s32 %s11, %s18
    %p20 = scmp.eq.s32.totalorder %s19, 0
    %s22 = sadd.s32 %s21, 1
    %s23 = scalar_select %p20, %s21, %s22
    %p26 = pneg %p20
    %p27 = scmp.eq.s32.totalorder %s11, 1
    %p28 = por %p26, %p27
    %p29 = scmp.ne.s32.totalorder %s21, %s24
    %p30 = scmp.eq.s32.totalorder %s11, 0
    %p31 = por %p29, %p30
    %p32 = scmp.ne.s32.totalorder %s21, %s24
    %p33 = scmp.eq.s32.totalorder %s16, 1
    %p34 = por %p32, %p33
    %p35 = scmp.ne.s32.totalorder %s24, %s25
    %p36 = scmp.eq.s32.totalorder %s16, 0
    %p37 = por %p35, %p36
    %p38 = scmp.ne.s32.totalorder %s24, %s25
    %p39 = scmp.eq.s32.totalorder %s17, 1
    %p40 = por %p38, %p39
    %p42 = scmp.ne.s32.totalorder %s25, %s41
    %p43 = scmp.eq.s32.totalorder %s17, 0
    %p44 = por %p42, %p43
    %s46 = sadd.s32 %s45, 1
    %p49 = scmp.eq.s32.totalorder %s11, 1
    %p50 = scmp.ne.s32.totalorder %s45, %s47
    %p51 = scmp.eq.s32.totalorder %s11, 0
    %p52 = por %p50, %p51
    %p53 = scmp.ne.s32.totalorder %s45, %s47
    %p54 = scmp.eq.s32.totalorder %s16, 1
    %p55 = por %p53, %p54
    %p56 = scmp.ne.s32.totalorder %s47, %s48
    %p57 = scmp.eq.s32.totalorder %s16, 0
    %p58 = por %p56, %p57
    %p59 = scmp.ne.s32.totalorder %s47, %s48
    %p60 = scmp.eq.s32.totalorder %s17, 1
    %p61 = por %p59, %p60
    %p63 = scmp.ne.s32.totalorder %s48, %s62
    %p64 = scmp.eq.s32.totalorder %s17, 0
    %p65 = por %p63, %p64
    %s67 = sadd.s32 %s66, 1
    %p70 = scmp.eq.s32.totalorder %s11, 1
    %p71 = scmp.ne.s32.totalorder %s66, %s68
    %p72 = scmp.eq.s32.totalorder %s11, 0
    %p73 = por %p71, %p72
    %p74 = scmp.ne.s32.totalorder %s66, %s68
    %p75 = scmp.eq.s32.totalorder %s16, 1
    %p76 = por %p74, %p75
    %p77 = scmp.ne.s32.totalorder %s68, %s69
    %p78 = scmp.eq.s32.totalorder %s16, 0
    %p79 = por %p77, %p78
    %p80 = scmp.ne.s32.totalorder %s68, %s69
    %p81 = scmp.eq.s32.totalorder %s17, 1
    %p82 = por %p80, %p81
    %p84 = scmp.ne.s32.totalorder %s69, %s83
    %p85 = scmp.eq.s32.totalorder %s17, 0
    %p86 = por %p84, %p85
    %s88 = sadd.s32 %s87, 1
    %p91 = scmp.eq.s32.totalorder %s11, 1
    %p92 = scmp.ne.s32.totalorder %s87, %s89
    %p93 = scmp.eq.s32.totalorder %s11, 0
    %p94 = por %p92, %p93
    %p95 = scmp.ne.s32.totalorder %s87, %s89
    %p96 = scmp.eq.s32.totalorder %s16, 1
    %p97 = por %p95, %p96
    %p98 = scmp.ne.s32.totalorder %s89, %s90
    %p99 = scmp.eq.s32.totalorder %s16, 0
    %p100 = por %p98, %p99
    %p101 = scmp.ne.s32.totalorder %s89, %s90
    %p102 = scmp.eq.s32.totalorder %s17, 1
    %p103 = por %p101, %p102
    %p105 = scmp.ne.s32.totalorder %s90, %s104
    %p106 = scmp.eq.s32.totalorder %s17, 0
    %p107 = por %p105, %p106
    %s109 = sadd.s32 %s108, 1
    %p112 = scmp.eq.s32.totalorder %s11, 1
    %p113 = scmp.ne.s32.totalorder %s108, %s110
    %p114 = scmp.eq.s32.totalorder %s11, 0
    %p115 = por %p113, %p114
    %p116 = scmp.ne.s32.totalorder %s108, %s110
    %p117 = scmp.eq.s32.totalorder %s16, 1
    %p118 = por %p116, %p117
    %p119 = scmp.ne.s32.totalorder %s110, %s111
    %p120 = scmp.eq.s32.totalorder %s16, 0
    %p121 = por %p119, %p120
    %p122 = scmp.ne.s32.totalorder %s110, %s111
    %p123 = scmp.eq.s32.totalorder %s17, 1
    %p124 = por %p122, %p123
    %p126 = scmp.ne.s32.totalorder %s111, %s125
    %p127 = scmp.eq.s32.totalorder %s17, 0
    %p128 = por %p126, %p127
    %s129 = ssub.s32 %s11, %s18
    %p130 = scmp.eq.s32.totalorder %s129, 0
    %s132 = sadd.s32 %s131, 1
    %s133 = scalar_select %p130, %s131, %s132
    %p136 = pneg %p130
    %p137 = scmp.eq.s32.totalorder %s11, 1
    %p138 = por %p136, %p137
    %p139 = scmp.ne.s32.totalorder %s131, %s134
    %p140 = scmp.eq.s32.totalorder %s11, 0
    %p141 = por %p139, %p140
    %p142 = scmp.ne.s32.totalorder %s131, %s134
    %p143 = scmp.eq.s32.totalorder %s16, 1
    %p144 = por %p142, %p143
    %p145 = scmp.ne.s32.totalorder %s134, %s135
    %p146 = scmp.eq.s32.totalorder %s16, 0
    %p147 = por %p145, %p146
    %p148 = scmp.ne.s32.totalorder %s134, %s135
    %p149 = scmp.eq.s32.totalorder %s17, 1
    %p150 = por %p148, %p149
    %p152 = scmp.ne.s32.totalorder %s135, %s151
    %p153 = scmp.eq.s32.totalorder %s17, 0
    %p154 = por %p152, %p153
    %p155 = scmp.le.s32.totalorder 1, %s11
    %p156 = scmp.lt.s32.totalorder %s11, 3
    %p157 = pnand %p155, %p156
    %p158 = pneg %p157
    // Predicated region
    $region9: #{conv_block.1} parent=5 // pred_check
      _
    $region10: #{conv_block.1} parent=5 // pred_check_branch
      %160 = sbr.rel (%p157) target = $region12
    $region11: #{conv_block.1} parent=5 // pred_region
      %s161 = ssub.s32 %s11, 1
      // Predicated region
      $region13: #{conv_block.1} parent=11 // pred_check
        %p162 = pneg %p58
      $region14: #{conv_block.1} parent=11 // pred_check_branch
        %164 = sbr.rel (%p162) target = $region16
      $region15: #{conv_block.1} parent=11 // pred_region
        _
      $region16: #{conv_block.1} parent=11 // pred_fallthru
        _
      // Predicated region
      $region17: #{conv_block.1} parent=11 // pred_check
        %p165 = pneg %p79
      $region18: #{conv_block.1} parent=11 // pred_check_branch
        %167 = sbr.rel (%p165) target = $region20
      $region19: #{conv_block.1} parent=11 // pred_region
        _
      $region20: #{conv_block.1} parent=11 // pred_fallthru
        _
      // Predicated region
      $region21: #{conv_block.1} parent=11 // pred_check
        %p168 = pneg %p100
      $region22: #{conv_block.1} parent=11 // pred_check_branch
        %170 = sbr.rel (%p168) target = $region24
      $region23: #{conv_block.1} parent=11 // pred_region
        _
      $region24: #{conv_block.1} parent=11 // pred_fallthru
        _
      // Predicated region
      $region25: #{conv_block.1} parent=11 // pred_check
        %p171 = pneg %p121
      $region26: #{conv_block.1} parent=11 // pred_check_branch
        %173 = sbr.rel (%p171) target = $region28
      $region27: #{conv_block.1} parent=11 // pred_region
        _
      $region28: #{conv_block.1} parent=11 // pred_fallthru
        _
    $region12: #{conv_block.1} parent=5 // pred_fallthru
      _
    %p174 = scmp.lt.s32.totalorder %s11, 2
    // Predicated region
    $region29: #{conv_block.1} parent=5 // pred_check
      %p175 = pneg %p174
    $region30: #{conv_block.1} parent=5 // pred_check_branch
      %177 = sbr.rel (%p175) target = $region32
    $region31: #{conv_block.1} parent=5 // pred_region
      // Predicated region
      $region33: #{conv_block.1} parent=31 // pred_check
        %p178 = pneg %p31
      $region34: #{conv_block.1} parent=31 // pred_check_branch
        %180 = sbr.rel (%p178) target = $region36
      $region35: #{conv_block.1} parent=31 // pred_region
        %p181 = scmp.lt.s32.totalorder %s11, 1
        %s182 = scalar_select %p181, %s11, 1
        %s183 = smul.addr %s182, 2
        %s184 = smul.addr %s183, 8
        %s185 = scalar_lea.vmem %s0, %s184
      $region36: #{conv_block.1} parent=31 // pred_fallthru
        _
    $region32: #{conv_block.1} parent=5 // pred_fallthru
      _
    %p186 = scmp.le.s32.totalorder 1, %s11
    %p187 = scmp.lt.s32.totalorder %s11, 3
    %p188 = pnand %p186, %p187
    %p189 = pneg %p188
    // Predicated region
    $region37: #{conv_block.1} parent=5 // pred_check
      _
    $region38: #{conv_block.1} parent=5 // pred_check_branch
      %191 = sbr.rel (%p188) target = $region40
    $region39: #{conv_block.1} parent=5 // pred_region
      %s192 = ssub.s32 %s11, 1
      %p193 = scmp.lt.s32.totalorder %s16, 1
      %s194 = scalar_select %p193, %s16, 1
      %s195 = smul.addr %s194, 2
      %s196 = smul.addr %s195, 8
      %s197 = scalar_lea.vmem %s0, %s196
      %p198 = pneg %p37
      %p199 = pneg %p34
      %p200 = pneg %p58
      %p201 = pneg %p55
      %p202 = pneg %p79
      %p203 = pneg %p76
      %p204 = pneg %p100
      %p205 = pneg %p97
      %p206 = pneg %p121
      %p207 = pneg %p118
      %p208 = pneg %p147
      %p209 = pneg %p144
      %p210 = scmp.lt.s32.totalorder %s16, 1
      %s211 = scalar_select %p210, %s16, 1
      %s212 = smul.addr %s211, 2
      %s213 = smul.addr %s212, 8
      %s214 = scalar_lea.vmem %s5, %s213
      %p215 = scmp.lt.s32.totalorder %s16, 1
      %s216 = scalar_select %p215, %s16, 1
      %s217 = smul.addr %s216, 2
      %s218 = smul.addr %s217, 8
      %s219 = scalar_lea.vmem %s0, %s218
      %p220 = scmp.lt.s32.totalorder %s16, 1
      %s221 = scalar_select %p220, %s16, 1
      %s222 = smul.addr %s221, 2
      %s223 = smul.addr %s222, 8
      %s224 = scalar_lea.vmem %s5, %s223
      %v225 = vld [vmem:[%s219] sm:$0xff]
      %v226 = vld [vmem:[%s219 + $0x8] sm:$0xff]
      %v227 = vld [vmem:[%s1] sm:$0xff]
      %v228 = vld [vmem:[%s1 + $0x8] sm:$0xff]
      %v229 = vld [vmem:[%s1 + $0x10] sm:$0xff]
      %v230 = vld [vmem:[%s1 + $0x18] sm:$0xff]
      %v231 = vld [vmem:[%s1 + $0x20] sm:$0xff]
      %v232 = vld [vmem:[%s1 + $0x28] sm:$0xff]
      %v233 = vld [vmem:[%s1 + $0x30] sm:$0xff]
      %v234 = vld [vmem:[%s1 + $0x38] sm:$0xff]
      %vm235 = vcmask 523264
      %v237 = vsel %vm235, %v225, 0
      %v240 = vsel %vm235, %v226, 0
      %242 = vmatprep.subr.mxu0 0.0
      %243 = vmatpush1.msra.mxu0 %v227
      %244 = vmatprep.subr.mxu0 0.0
      %245 = vmatpush1.msra.mxu0 %v228
      %246 = vmatprep.subr.mxu0 0.0
      %247 = vmatpush1.msra.mxu0 %v229
      %248 = vmatprep.subr.mxu0 0.0
      %249 = vmatpush1.msra.mxu0 %v230
      %250 = vmatprep.subr.mxu0 0.0
      %251 = vmatpush1.msra.mxu0 %v231
      %252 = vmatprep.subr.mxu0 0.0
      %253 = vmatpush1.msra.mxu0 %v232
      %254 = vmatprep.subr.mxu0 0.0
      %255 = vmatpush1.msra.mxu0 %v233
      %256 = vmatprep.subr.mxu0 0.0
      %257 = vmatpush1.msra.mxu0 %v234
      %258 = vmatprep.subr.mxu0 0.0
      %259 = vmatpush1.msra.mxu0 0.0
      %260 = vmatprep.subr.mxu0 0.0
      %261 = vmatpush1.msra.mxu0 0.0
      %262 = vmatprep.subr.mxu0 0.0
      %263 = vmatpush1.msra.mxu0 0.0
      %264 = vmatprep.subr.mxu0 0.0
      %265 = vmatpush1.msra.mxu0 0.0
      %266 = vmatprep.subr.mxu0 0.0
      %267 = vmatpush1.msra.mxu0 0.0
      %268 = vmatprep.subr.mxu0 0.0
      %269 = vmatpush1.msra.mxu0 0.0
      %270 = vmatprep.subr.mxu0 0.0
      %271 = vmatpush1.msra.mxu0 0.0
      %272 = vmatprep.subr.mxu0 0.0
      %273 = vmatpush1.msra.mxu0 0.0
      %274 = vmatprep.subr.mxu0 0.0
      %275 = vmatpush1.msra.mxu0 0.0
      %276 = vmatprep.subr.mxu0 0.0
      %277 = vmatpush1.msra.mxu0 0.0
      %278 = vmatprep.subr.mxu0 0.0
      %279 = vmatpush1.msra.mxu0 0.0
      %280 = vmatprep.subr.mxu0 0.0
      %281 = vmatpush1.msra.mxu0 0.0
      %282 = vmatprep.subr.mxu0 0.0
      %283 = vmatpush1.msra.mxu0 0.0
      %284 = vmatprep.subr.mxu0 0.0
      %285 = vmatpush1.msra.mxu0 0.0
      %286 = vmatprep.subr.mxu0 0.0
      %287 = vmatpush1.msra.mxu0 0.0
      %288 = vmatprep.subr.mxu0 0.0
      %289 = vmatpush1.msra.mxu0 0.0
      %290 = vmatprep.subr.mxu0 0.0
      %291 = vmatpush1.msra.mxu0 0.0
      %292 = vmatprep.subr.mxu0 0.0
      %293 = vmatpush1.msra.mxu0 0.0
      %294 = vmatprep.subr.mxu0 0.0
      %295 = vmatpush1.msra.mxu0 0.0
      %296 = vmatprep.subr.mxu0 0.0
      %297 = vmatpush1.msra.mxu0 0.0
      %298 = vmatprep.subr.mxu0 0.0
      %299 = vmatpush1.msra.mxu0 0.0
      %300 = vmatprep.subr.mxu0 0.0
      %301 = vmatpush1.msra.mxu0 0.0
      %302 = vmatprep.subr.mxu0 0.0
      %303 = vmatpush1.msra.mxu0 0.0
      %304 = vmatprep.subr.mxu0 0.0
      %305 = vmatpush1.msra.mxu0 0.0
      %306 = vmatprep.mubr.f32.mxu0 0.0
      %307 = vmatmul.mubr.f32.gmra.mrb[0].mxu0 %v237
      %v308 = vpop.f32.mrb[0].mxu0
      %v309 = vadd.f32 0.0, %v308
      %v310 = vpop.f32.mrb[0].mxu0
      %311 = vmatprep.mubr.f32.mxu0 0.0
      %312 = vmatmul.mubr.f32.gmra.mrb[0].mxu0 %v240
      %v313 = vpop.f32.mrb[0].mxu0
      %v314 = vadd.f32 0.0, %v313
      %v315 = vpop.f32.mrb[0].mxu0
      %316 = vdwg.mxu0
      %s317 = scalar_lea.vmem %s1, 64
      %v318 = vld [vmem:[%s317] sm:$0xff]
      %v319 = vld [vmem:[%s317 + $0x8] sm:$0xff]
      %v320 = vld [vmem:[%s317 + $0x10] sm:$0xff]
      %v321 = vld [vmem:[%s317 + $0x18] sm:$0xff]
      %v322 = vld [vmem:[%s317 + $0x20] sm:$0xff]
      %v323 = vld [vmem:[%s317 + $0x28] sm:$0xff]
      %v324 = vld [vmem:[%s317 + $0x30] sm:$0xff]
      %v325 = vld [vmem:[%s317 + $0x38] sm:$0xff]
      %326 = vmatprep.subr.mxu0 0.0
      %327 = vmatpush1.msra.mxu0 %v318
      %328 = vmatprep.subr.mxu0 0.0
      %329 = vmatpush1.msra.mxu0 %v319
      %330 = vmatprep.subr.mxu0 0.0
      %331 = vmatpush1.msra.mxu0 %v320
      %332 = vmatprep.subr.mxu0 0.0
      %333 = vmatpush1.msra.mxu0 %v321
      %334 = vmatprep.subr.mxu0 0.0
      %335 = vmatpush1.msra.mxu0 %v322
      %336 = vmatprep.subr.mxu0 0.0
      %337 = vmatpush1.msra.mxu0 %v323
      %338 = vmatprep.subr.mxu0 0.0
      %339 = vmatpush1.msra.mxu0 %v324
      %340 = vmatprep.subr.mxu0 0.0
      %341 = vmatpush1.msra.mxu0 %v325
      %342 = vmatprep.subr.mxu0 0.0
      %343 = vmatpush1.msra.mxu0 0.0
      %344 = vmatprep.subr.mxu0 0.0
      %345 = vmatpush1.msra.mxu0 0.0
      %346 = vmatprep.subr.mxu0 0.0
      %347 = vmatpush1.msra.mxu0 0.0
      %348 = vmatprep.subr.mxu0 0.0
      %349 = vmatpush1.msra.mxu0 0.0
      %350 = vmatprep.subr.mxu0 0.0
      %351 = vmatpush1.msra.mxu0 0.0
      %352 = vmatprep.subr.mxu0 0.0
      %353 = vmatpush1.msra.mxu0 0.0
      %354 = vmatprep.subr.mxu0 0.0
      %355 = vmatpush1.msra.mxu0 0.0
      %356 = vmatprep.subr.mxu0 0.0
      %357 = vmatpush1.msra.mxu0 0.0
      %358 = vmatprep.subr.mxu0 0.0
      %359 = vmatpush1.msra.mxu0 0.0
      %360 = vmatprep.subr.mxu0 0.0
      %361 = vmatpush1.msra.mxu0 0.0
      %362 = vmatprep.subr.mxu0 0.0
      %363 = vmatpush1.msra.mxu0 0.0
      %364 = vmatprep.subr.mxu0 0.0
      %365 = vmatpush1.msra.mxu0 0.0
      %366 = vmatprep.subr.mxu0 0.0
      %367 = vmatpush1.msra.mxu0 0.0
      %368 = vmatprep.subr.mxu0 0.0
      %369 = vmatpush1.msra.mxu0 0.0
      %370 = vmatprep.subr.mxu0 0.0
      %371 = vmatpush1.msra.mxu0 0.0
      %372 = vmatprep.subr.mxu0 0.0
      %373 = vmatpush1.msra.mxu0 0.0
      %374 = vmatprep.subr.mxu0 0.0
      %375 = vmatpush1.msra.mxu0 0.0
      %376 = vmatprep.subr.mxu0 0.0
      %377 = vmatpush1.msra.mxu0 0.0
      %378 = vmatprep.subr.mxu0 0.0
      %379 = vmatpush1.msra.mxu0 0.0
      %380 = vmatprep.subr.mxu0 0.0
      %381 = vmatpush1.msra.mxu0 0.0
      %382 = vmatprep.subr.mxu0 0.0
      %383 = vmatpush1.msra.mxu0 0.0
      %384 = vmatprep.subr.mxu0 0.0
      %385 = vmatpush1.msra.mxu0 0.0
      %386 = vmatprep.subr.mxu0 0.0
      %387 = vmatpush1.msra.mxu0 0.0
      %388 = vmatprep.subr.mxu0 0.0
      %389 = vmatpush1.msra.mxu0 0.0
      %390 = vmatprep.mubr.f32.mxu0 0.0
      %391 = vmatmul.mubr.f32.gmra.mrb[0].mxu0 %v237
      %v392 = vpop.f32.mrb[0].mxu0
      %v393 = vadd.f32 0.0, %v392
      %v394 = vpop.f32.mrb[0].mxu0
      %395 = vmatprep.mubr.f32.mxu0 0.0
      %396 = vmatmul.mubr.f32.gmra.mrb[0].mxu0 %v240
      %v397 = vpop.f32.mrb[0].mxu0
      %v398 = vadd.f32 0.0, %v397
      %v399 = vpop.f32.mrb[0].mxu0
      %400 = vdwg.mxu0
      %s401 = scalar_lea.vmem %s1, 128
      %v402 = vld [vmem:[%s401] sm:$0xff]
      %v403 = vld [vmem:[%s401 + $0x8] sm:$0xff]
      %v404 = vld [vmem:[%s401 + $0x10] sm:$0xff]
      %v405 = vld [vmem:[%s401 + $0x18] sm:$0xff]
      %v406 = vld [vmem:[%s401 + $0x20] sm:$0xff]
      %v407 = vld [vmem:[%s401 + $0x28] sm:$0xff]
      %v408 = vld [vmem:[%s401 + $0x30] sm:$0xff]
      %v409 = vld [vmem:[%s401 + $0x38] sm:$0xff]
      %410 = vmatprep.subr.mxu0 0.0
      %411 = vmatpush1.msra.mxu0 %v402
      %412 = vmatprep.subr.mxu0 0.0
      %413 = vmatpush1.msra.mxu0 %v403
      %414 = vmatprep.subr.mxu0 0.0
      %415 = vmatpush1.msra.mxu0 %v404
      %416 = vmatprep.subr.mxu0 0.0
      %417 = vmatpush1.msra.mxu0 %v405
      %418 = vmatprep.subr.mxu0 0.0
      %419 = vmatpush1.msra.mxu0 %v406
      %420 = vmatprep.subr.mxu0 0.0
      %421 = vmatpush1.msra.mxu0 %v407
      %422 = vmatprep.subr.mxu0 0.0
      %423 = vmatpush1.msra.mxu0 %v408
      %424 = vmatprep.subr.mxu0 0.0
      %425 = vmatpush1.msra.mxu0 %v409
      %426 = vmatprep.subr.mxu0 0.0
      %427 = vmatpush1.msra.mxu0 0.0
      %428 = vmatprep.subr.mxu0 0.0
      %429 = vmatpush1.msra.mxu0 0.0
      %430 = vmatprep.subr.mxu0 0.0
      %431 = vmatpush1.msra.mxu0 0.0
      %432 = vmatprep.subr.mxu0 0.0
      %433 = vmatpush1.msra.mxu0 0.0
      %434 = vmatprep.subr.mxu0 0.0
      %435 = vmatpush1.msra.mxu0 0.0
      %436 = vmatprep.subr.mxu0 0.0
      %437 = vmatpush1.msra.mxu0 0.0
      %438 = vmatprep.subr.mxu0 0.0
      %439 = vmatpush1.msra.mxu0 0.0
      %440 = vmatprep.subr.mxu0 0.0
      %441 = vmatpush1.msra.mxu0 0.0
      %442 = vmatprep.subr.mxu0 0.0
      %443 = vmatpush1.msra.mxu0 0.0
      %444 = vmatprep.subr.mxu0 0.0
      %445 = vmatpush1.msra.mxu0 0.0
      %446 = vmatprep.subr.mxu0 0.0
      %447 = vmatpush1.msra.mxu0 0.0
      %448 = vmatprep.subr.mxu0 0.0
      %449 = vmatpush1.msra.mxu0 0.0
      %450 = vmatprep.subr.mxu0 0.0
      %451 = vmatpush1.msra.mxu0 0.0
      %452 = vmatprep.subr.mxu0 0.0
      %453 = vmatpush1.msra.mxu0 0.0
      %454 = vmatprep.subr.mxu0 0.0
      %455 = vmatpush1.msra.mxu0 0.0
      %456 = vmatprep.subr.mxu0 0.0
      %457 = vmatpush1.msra.mxu0 0.0
      %458 = vmatprep.subr.mxu0 0.0
      %459 = vmatpush1.msra.mxu0 0.0
      %460 = vmatprep.subr.mxu0 0.0
      %461 = vmatpush1.msra.mxu0 0.0
      %462 = vmatprep.subr.mxu0 0.0
      %463 = vmatpush1.msra.mxu0 0.0
      %464 = vmatprep.subr.mxu0 0.0
      %465 = vmatpush1.msra.mxu0 0.0
      %466 = vmatprep.subr.mxu0 0.0
      %467 = vmatpush1.msra.mxu0 0.0
      %468 = vmatprep.subr.mxu0 0.0
      %469 = vmatpush1.msra.mxu0 0.0
      %470 = vmatprep.subr.mxu0 0.0
      %471 = vmatpush1.msra.mxu0 0.0
      %472 = vmatprep.subr.mxu0 0.0
      %473 = vmatpush1.msra.mxu0 0.0
      %474 = vmatprep.mubr.f32.mxu0 0.0
      %475 = vmatmul.mubr.f32.gmra.mrb[0].mxu0 %v237
      %v476 = vpop.f32.mrb[0].mxu0
      %v477 = vadd.f32 0.0, %v476
      %v478 = vpop.f32.mrb[0].mxu0
      %479 = vmatprep.mubr.f32.mxu0 0.0
      %480 = vmatmul.mubr.f32.gmra.mrb[0].mxu0 %v240
      %v481 = vpop.f32.mrb[0].mxu0
      %v482 = vadd.f32 0.0, %v481
      %v483 = vpop.f32.mrb[0].mxu0
      %484 = vdwg.mxu0
      %v485 = vlaneseq
      %v486 = vshrl.u32 %v485, 7
      %v487 = vadd.s32 %v486, 8
      %vm488 = vcmp.eq.s32.totalorder %v486, 0
      %vm489 = vcmp.eq.s32.totalorder %v487, 0
      %v490 = vrot.slane %v309, 7
      %v491 = vrot.slane %v314, 7
      %vm492 = vcmp.lt.s32.totalorder %v486, 1
      %v493 = vsel %vm492, %v490, %v491
      %v494 = vsel %vm492, %v491, %v490
      %v495 = vsel %vm488, 0.0, %v494
      %v496 = vsel %vm489, 0.0, %v493
      %vm497 = vcmp.eq.s32.totalorder %v486, 15
      %vm498 = vcmp.eq.s32.totalorder %v487, 15
      %v499 = vrot.slane %v477, 1
      %v500 = vrot.slane %v482, 1
      %vm501 = vcmp.lt.s32.totalorder %v486, 7
      %v502 = vsel %vm501, %v499, %v500
      %v503 = vsel %vm501, %v500, %v499
      %v504 = vsel %vm497, 0.0, %v502
      %v505 = vsel %vm498, 0.0, %v503
      %v506 = vadd.f32 %v495, %v393
      %v507 = vadd.f32 %v496, %v398
      %v508 = vadd.f32 %v506, %v504
      %v509 = vadd.f32 %v507, %v505
      %v510 = vld [vmem:[%s2] sm:$0x1]
      %v512 = vlaneseq
      %v513 = vshrl.u32 %v512, 7
      %v514 = vsub.s32 0, %v513
      %v515 = vrot.slane %v510, %v514
      %v517 = vadd.f32 %v508, %v515
      %v518 = vadd.f32 %v509, %v515
      %v519 = vmax.f32 %v517, 0.0
      %v520 = vmax.f32 %v518, 0.0
      %v521 = vld [vmem:[%s3] sm:$0xff]
      %v522 = vld [vmem:[%s3 + $0x8] sm:$0xff]
      %v523 = vld [vmem:[%s3 + $0x10] sm:$0xff]
      %v524 = vld [vmem:[%s3 + $0x18] sm:$0xff]
      %v525 = vld [vmem:[%s3 + $0x20] sm:$0xff]
      %v526 = vld [vmem:[%s3 + $0x28] sm:$0xff]
      %v527 = vld [vmem:[%s3 + $0x30] sm:$0xff]
      %v528 = vld [vmem:[%s3 + $0x38] sm:$0xff]
      %v529 = vld [vmem:[%s3 + $0x40] sm:$0xff]
      %v530 = vld [vmem:[%s3 + $0x48] sm:$0xff]
      %v531 = vld [vmem:[%s3 + $0x50] sm:$0xff]
      %v532 = vld [vmem:[%s3 + $0x58] sm:$0xff]
      %v533 = vld [vmem:[%s3 + $0x60] sm:$0xff]
      %v534 = vld [vmem:[%s3 + $0x68] sm:$0xff]
      %v535 = vld [vmem:[%s3 + $0x70] sm:$0xff]
      %v536 = vld [vmem:[%s3 + $0x78] sm:$0xff]
      %537 = vmatprep.subr.mxu0 0.0
      %538 = vmatpush1.msra.mxu0 %v521
      %539 = vmatprep.subr.mxu0 0.0
      %540 = vmatpush1.msra.mxu0 %v522
      %541 = vmatprep.subr.mxu0 0.0
      %542 = vmatpush1.msra.mxu0 %v523
      %543 = vmatprep.subr.mxu0 0.0
      %544 = vmatpush1.msra.mxu0 %v524
      %545 = vmatprep.subr.mxu0 0.0
      %546 = vmatpush1.msra.mxu0 %v525
      %547 = vmatprep.subr.mxu0 0.0
      %548 = vmatpush1.msra.mxu0 %v526
      %549 = vmatprep.subr.mxu0 0.0
      %550 = vmatpush1.msra.mxu0 %v527
      %551 = vmatprep.subr.mxu0 0.0
      %552 = vmatpush1.msra.mxu0 %v528
      %553 = vmatprep.subr.mxu0 0.0
      %554 = vmatpush1.msra.mxu0 %v529
      %555 = vmatprep.subr.mxu0 0.0
      %556 = vmatpush1.msra.mxu0 %v530
      %557 = vmatprep.subr.mxu0 0.0
      %558 = vmatpush1.msra.mxu0 %v531
      %559 = vmatprep.subr.mxu0 0.0
      %560 = vmatpush1.msra.mxu0 %v532
      %561 = vmatprep.subr.mxu0 0.0
      %562 = vmatpush1.msra.mxu0 %v533
      %563 = vmatprep.subr.mxu0 0.0
      %564 = vmatpush1.msra.mxu0 %v534
      %565 = vmatprep.subr.mxu0 0.0
      %566 = vmatpush1.msra.mxu0 %v535
      %567 = vmatprep.subr.mxu0 0.0
      %568 = vmatpush1.msra.mxu0 %v536
      %569 = vmatprep.subr.mxu0 0.0
      %570 = vmatpush1.msra.mxu0 0.0
      %571 = vmatprep.subr.mxu0 0.0
      %572 = vmatpush1.msra.mxu0 0.0
      %573 = vmatprep.subr.mxu0 0.0
      %574 = vmatpush1.msra.mxu0 0.0
      %575 = vmatprep.subr.mxu0 0.0
      %576 = vmatpush1.msra.mxu0 0.0
      %577 = vmatprep.subr.mxu0 0.0
      %578 = vmatpush1.msra.mxu0 0.0
      %579 = vmatprep.subr.mxu0 0.0
      %580 = vmatpush1.msra.mxu0 0.0
      %581 = vmatprep.subr.mxu0 0.0
      %582 = vmatpush1.msra.mxu0 0.0
      %583 = vmatprep.subr.mxu0 0.0
      %584 = vmatpush1.msra.mxu0 0.0
      %585 = vmatprep.subr.mxu0 0.0
      %586 = vmatpush1.msra.mxu0 0.0
      %587 = vmatprep.subr.mxu0 0.0
      %588 = vmatpush1.msra.mxu0 0.0
      %589 = vmatprep.subr.mxu0 0.0
      %590 = vmatpush1.msra.mxu0 0.0
      %591 = vmatprep.subr.mxu0 0.0
      %592 = vmatpush1.msra.mxu0 0.0
      %593 = vmatprep.subr.mxu0 0.0
      %594 = vmatpush1.msra.mxu0 0.0
      %595 = vmatprep.subr.mxu0 0.0
      %596 = vmatpush1.msra.mxu0 0.0
      %597 = vmatprep.subr.mxu0 0.0
      %598 = vmatpush1.msra.mxu0 0.0
      %599 = vmatprep.subr.mxu0 0.0
      %600 = vmatpush1.msra.mxu0 0.0
      %601 = vmatprep.mubr.f32.mxu0 0.0
      %602 = vmatmul.mubr.f32.gmra.mrb[0].mxu0 %v519
      %v603 = vpop.f32.mrb[0].mxu0
      %v604 = vadd.f32 0.0, %v603
      %v605 = vpop.f32.mrb[0].mxu0
      %606 = vmatprep.mubr.f32.mxu0 0.0
      %607 = vmatmul.mubr.f32.gmra.mrb[0].mxu0 %v520
      %v608 = vpop.f32.mrb[0].mxu0
      %v609 = vadd.f32 0.0, %v608
      %v610 = vpop.f32.mrb[0].mxu0
      %611 = vdwg.mxu0
      %s612 = scalar_lea.vmem %s3, 128
      %v613 = vld [vmem:[%s612] sm:$0xff]
      %v614 = vld [vmem:[%s612 + $0x8] sm:$0xff]
      %v615 = vld [vmem:[%s612 + $0x10] sm:$0xff]
      %v616 = vld [vmem:[%s612 + $0x18] sm:$0xff]
      %v617 = vld [vmem:[%s612 + $0x20] sm:$0xff]
      %v618 = vld [vmem:[%s612 + $0x28] sm:$0xff]
      %v619 = vld [vmem:[%s612 + $0x30] sm:$0xff]
      %v620 = vld [vmem:[%s612 + $0x38] sm:$0xff]
      %v621 = vld [vmem:[%s612 + $0x40] sm:$0xff]
      %v622 = vld [vmem:[%s612 + $0x48] sm:$0xff]
      %v623 = vld [vmem:[%s612 + $0x50] sm:$0xff]
      %v624 = vld [vmem:[%s612 + $0x58] sm:$0xff]
      %v625 = vld [vmem:[%s612 + $0x60] sm:$0xff]
      %v626 = vld [vmem:[%s612 + $0x68] sm:$0xff]
      %v627 = vld [vmem:[%s612 + $0x70] sm:$0xff]
      %v628 = vld [vmem:[%s612 + $0x78] sm:$0xff]
      %629 = vmatprep.subr.mxu0 0.0
      %630 = vmatpush1.msra.mxu0 %v613
      %631 = vmatprep.subr.mxu0 0.0
      %632 = vmatpush1.msra.mxu0 %v614
      %633 = vmatprep.subr.mxu0 0.0
      %634 = vmatpush1.msra.mxu0 %v615
      %635 = vmatprep.subr.mxu0 0.0
      %636 = vmatpush1.msra.mxu0 %v616
      %637 = vmatprep.subr.mxu0 0.0
      %638 = vmatpush1.msra.mxu0 %v617
      %639 = vmatprep.subr.mxu0 0.0
      %640 = vmatpush1.msra.mxu0 %v618
      %641 = vmatprep.subr.mxu0 0.0
      %642 = vmatpush1.msra.mxu0 %v619
      %643 = vmatprep.subr.mxu0 0.0
      %644 = vmatpush1.msra.mxu0 %v620
      %645 = vmatprep.subr.mxu0 0.0
      %646 = vmatpush1.msra.mxu0 %v621
      %647 = vmatprep.subr.mxu0 0.0
      %648 = vmatpush1.msra.mxu0 %v622
      %649 = vmatprep.subr.mxu0 0.0
      %650 = vmatpush1.msra.mxu0 %v623
      %651 = vmatprep.subr.mxu0 0.0
      %652 = vmatpush1.msra.mxu0 %v624
      %653 = vmatprep.subr.mxu0 0.0
      %654 = vmatpush1.msra.mxu0 %v625
      %655 = vmatprep.subr.mxu0 0.0
      %656 = vmatpush1.msra.mxu0 %v626
      %657 = vmatprep.subr.mxu0 0.0
      %658 = vmatpush1.msra.mxu0 %v627
      %659 = vmatprep.subr.mxu0 0.0
      %660 = vmatpush1.msra.mxu0 %v628
      %661 = vmatprep.subr.mxu0 0.0
      %662 = vmatpush1.msra.mxu0 0.0
      %663 = vmatprep.subr.mxu0 0.0
      %664 = vmatpush1.msra.mxu0 0.0
      %665 = vmatprep.subr.mxu0 0.0
      %666 = vmatpush1.msra.mxu0 0.0
      %667 = vmatprep.subr.mxu0 0.0
      %668 = vmatpush1.msra.mxu0 0.0
      %669 = vmatprep.subr.mxu0 0.0
      %670 = vmatpush1.msra.mxu0 0.0
      %671 = vmatprep.subr.mxu0 0.0
      %672 = vmatpush1.msra.mxu0 0.0
      %673 = vmatprep.subr.mxu0 0.0
      %674 = vmatpush1.msra.mxu0 0.0
      %675 = vmatprep.subr.mxu0 0.0
      %676 = vmatpush1.msra.mxu0 0.0
      %677 = vmatprep.subr.mxu0 0.0
      %678 = vmatpush1.msra.mxu0 0.0
      %679 = vmatprep.subr.mxu0 0.0
      %680 = vmatpush1.msra.mxu0 0.0
      %681 = vmatprep.subr.mxu0 0.0
      %682 = vmatpush1.msra.mxu0 0.0
      %683 = vmatprep.subr.mxu0 0.0
      %684 = vmatpush1.msra.mxu0 0.0
      %685 = vmatprep.subr.mxu0 0.0
      %686 = vmatpush1.msra.mxu0 0.0
      %687 = vmatprep.subr.mxu0 0.0
      %688 = vmatpush1.msra.mxu0 0.0
      %689 = vmatprep.subr.mxu0 0.0
      %690 = vmatpush1.msra.mxu0 0.0
      %691 = vmatprep.subr.mxu0 0.0
      %692 = vmatpush1.msra.mxu0 0.0
      %693 = vmatprep.mubr.f32.mxu0 0.0
      %694 = vmatmul.mubr.f32.gmra.mrb[0].mxu0 %v519
      %v695 = vpop.f32.mrb[0].mxu0
      %v696 = vadd.f32 0.0, %v695
      %v697 = vpop.f32.mrb[0].mxu0
      %698 = vmatprep.mubr.f32.mxu0 0.0
      %699 = vmatmul.mubr.f32.gmra.mrb[0].mxu0 %v520
      %v700 = vpop.f32.mrb[0].mxu0
      %v701 = vadd.f32 0.0, %v700
      %v702 = vpop.f32.mrb[0].mxu0
      %703 = vdwg.mxu0
      %s704 = scalar_lea.vmem %s3, 256
      %v705 = vld [vmem:[%s704] sm:$0xff]
      %v706 = vld [vmem:[%s704 + $0x8] sm:$0xff]
      %v707 = vld [vmem:[%s704 + $0x10] sm:$0xff]
      %v708 = vld [vmem:[%s704 + $0x18] sm:$0xff]
      %v709 = vld [vmem:[%s704 + $0x20] sm:$0xff]
      %v710 = vld [vmem:[%s704 + $0x28] sm:$0xff]
      %v711 = vld [vmem:[%s704 + $0x30] sm:$0xff]
      %v712 = vld [vmem:[%s704 + $0x38] sm:$0xff]
      %v713 = vld [vmem:[%s704 + $0x40] sm:$0xff]
      %v714 = vld [vmem:[%s704 + $0x48] sm:$0xff]
      %v715 = vld [vmem:[%s704 + $0x50] sm:$0xff]
      %v716 = vld [vmem:[%s704 + $0x58] sm:$0xff]
      %v717 = vld [vmem:[%s704 + $0x60] sm:$0xff]
      %v718 = vld [vmem:[%s704 + $0x68] sm:$0xff]
      %v719 = vld [vmem:[%s704 + $0x70] sm:$0xff]
      %v720 = vld [vmem:[%s704 + $0x78] sm:$0xff]
      %721 = vmatprep.subr.mxu0 0.0
      %722 = vmatpush1.msra.mxu0 %v705
      %723 = vmatprep.subr.mxu0 0.0
      %724 = vmatpush1.msra.mxu0 %v706
      %725 = vmatprep.subr.mxu0 0.0
      %726 = vmatpush1.msra.mxu0 %v707
      %727 = vmatprep.subr.mxu0 0.0
      %728 = vmatpush1.msra.mxu0 %v708
      %729 = vmatprep.subr.mxu0 0.0
      %730 = vmatpush1.msra.mxu0 %v709
      %731 = vmatprep.subr.mxu0 0.0
      %732 = vmatpush1.msra.mxu0 %v710
      %733 = vmatprep.subr.mxu0 0.0
      %734 = vmatpush1.msra.mxu0 %v711
      %735 = vmatprep.subr.mxu0 0.0
      %736 = vmatpush1.msra.mxu0 %v712
      %737 = vmatprep.subr.mxu0 0.0
      %738 = vmatpush1.msra.mxu0 %v713
      %739 = vmatprep.subr.mxu0 0.0
      %740 = vmatpush1.msra.mxu0 %v714
      %741 = vmatprep.subr.mxu0 0.0
      %742 = vmatpush1.msra.mxu0 %v715
      %743 = vmatprep.subr.mxu0 0.0
      %744 = vmatpush1.msra.mxu0 %v716
      %745 = vmatprep.subr.mxu0 0.0
      %746 = vmatpush1.msra.mxu0 %v717
      %747 = vmatprep.subr.mxu0 0.0
      %748 = vmatpush1.msra.mxu0 %v718
      %749 = vmatprep.subr.mxu0 0.0
      %750 = vmatpush1.msra.mxu0 %v719
      %751 = vmatprep.subr.mxu0 0.0
      %752 = vmatpush1.msra.mxu0 %v720
      %753 = vmatprep.subr.mxu0 0.0
      %754 = vmatpush1.msra.mxu0 0.0
      %755 = vmatprep.subr.mxu0 0.0
      %756 = vmatpush1.msra.mxu0 0.0
      %757 = vmatprep.subr.mxu0 0.0
      %758 = vmatpush1.msra.mxu0 0.0
      %759 = vmatprep.subr.mxu0 0.0
      %760 = vmatpush1.msra.mxu0 0.0
      %761 = vmatprep.subr.mxu0 0.0
      %762 = vmatpush1.msra.mxu0 0.0
      %763 = vmatprep.subr.mxu0 0.0
      %764 = vmatpush1.msra.mxu0 0.0
      %765 = vmatprep.subr.mxu0 0.0
      %766 = vmatpush1.msra.mxu0 0.0
      %767 = vmatprep.subr.mxu0 0.0
      %768 = vmatpush1.msra.mxu0 0.0
      %769 = vmatprep.subr.mxu0 0.0
      %770 = vmatpush1.msra.mxu0 0.0
      %771 = vmatprep.subr.mxu0 0.0
      %772 = vmatpush1.msra.mxu0 0.0
      %773 = vmatprep.subr.mxu0 0.0
      %774 = vmatpush1.msra.mxu0 0.0
      %775 = vmatprep.subr.mxu0 0.0
      %776 = vmatpush1.msra.mxu0 0.0
      %777 = vmatprep.subr.mxu0 0.0
      %778 = vmatpush1.msra.mxu0 0.0
      %779 = vmatprep.subr.mxu0 0.0
      %780 = vmatpush1.msra.mxu0 0.0
      %781 = vmatprep.subr.mxu0 0.0
      %782 = vmatpush1.msra.mxu0 0.0
      %783 = vmatprep.subr.mxu0 0.0
      %784 = vmatpush1.msra.mxu0 0.0
      %785 = vmatprep.mubr.f32.mxu0 0.0
      %786 = vmatmul.mubr.f32.gmra.mrb[0].mxu0 %v519
      %v787 = vpop.f32.mrb[0].mxu0
      %v788 = vadd.f32 0.0, %v787
      %v789 = vpop.f32.mrb[0].mxu0
      %790 = vmatprep.mubr.f32.mxu0 0.0
      %791 = vmatmul.mubr.f32.gmra.mrb[0].mxu0 %v520
      %v792 = vpop.f32.mrb[0].mxu0
      %v793 = vadd.f32 0.0, %v792
      %v794 = vpop.f32.mrb[0].mxu0
      %795 = vdwg.mxu0
      %v796 = vrot.slane %v604, 7
      %v797 = vrot.slane %v609, 7
      %v798 = vsel %vm492, %v796, %v797
      %v799 = vsel %vm492, %v797, %v796
      %v800 = vsel %vm488, 0.0, %v799
      %v801 = vsel %vm489, 0.0, %v798
      %v802 = vrot.slane %v788, 1
      %v803 = vrot.slane %v793, 1
      %v804 = vsel %vm501, %v802, %v803
      %v805 = vsel %vm501, %v803, %v802
      %v806 = vsel %vm497, 0.0, %v804
      %v807 = vsel %vm498, 0.0, %v805
      %v808 = vadd.f32 %v800, %v696
      %v809 = vadd.f32 %v801, %v701
      %v810 = vadd.f32 %v808, %v806
      %v811 = vadd.f32 %v809, %v807
      %v812 = vld [vmem:[%s4] sm:$0x1]
      %v814 = vlaneseq
      %v815 = vshrl.u32 %v814, 7
      %v816 = vsub.s32 0, %v815
      %v817 = vrot.slane %v812, %v816
      %v819 = vadd.f32 %v810, %v817
      %v820 = vadd.f32 %v811, %v817
      %v821 = vmax.f32 %v819, 0.0
      %v822 = vmax.f32 %v820, 0.0
      %823 = vst [vmem:[%s224] sm:$0xff] %v821
      %824 = vst [vmem:[%s224 + $0x8] sm:$0xff] %v822
      %p825 = scmp.lt.s32.totalorder %s16, 1
      %s826 = scalar_select %p825, %s16, 1
      %s827 = smul.addr %s826, 2
      %s828 = smul.addr %s827, 8
      %s829 = scalar_lea.vmem %s5, %s828
      // Predicated region
      $region41: #{conv_block.1} parent=39 // pred_check
        %p830 = pneg %p144
      $region42: #{conv_block.1} parent=39 // pred_check_branch
        %832 = sbr.rel (%p830) target = $region44
      $region43: #{conv_block.1} parent=39 // pred_region
        _
      $region44: #{conv_block.1} parent=39 // pred_fallthru
        _
    $region40: #{conv_block.1} parent=5 // pred_fallthru
      _
    %p833 = scmp.le.s32.totalorder 2, %s11
    // Predicated region
    $region45: #{conv_block.1} parent=5 // pred_check
      %p834 = pneg %p833
    $region46: #{conv_block.1} parent=5 // pred_check_branch
      %836 = sbr.rel (%p834) target = $region48
    $region47: #{conv_block.1} parent=5 // pred_region
      %s837 = ssub.s32 %s11, 2
      // Predicated region
      $region49: #{conv_block.1} parent=47 // pred_check
        %p838 = pneg %p150
      $region50: #{conv_block.1} parent=47 // pred_check_branch
        %840 = sbr.rel (%p838) target = $region52
      $region51: #{conv_block.1} parent=47 // pred_region
        %p841 = scmp.lt.s32.totalorder %s17, 1
        %s842 = scalar_select %p841, %s17, 1
        %s843 = smul.addr %s842, 2
        %s844 = smul.addr %s843, 8
        %s845 = scalar_lea.vmem %s5, %s844
      $region52: #{conv_block.1} parent=47 // pred_fallthru
        _
    $region48: #{conv_block.1} parent=5 // pred_fallthru
      _
  $region6: #{conv_block.1} parent=0 // loop_footer
    %s15 = sadd.s32 1, %s11
  $region7: #{conv_block.1} parent=0 // loop_footer_branch
    %10 = sbr.rel target = $region3
  $region8: #{conv_block.1} parent=0 // loop_exit
    _

</llo_original>
